<compile_context>
chip_gen: v7x
topology: tpu7x:2x2x1
jax: 0.10.0
libtpu: 0.0.40
codegen_flags: <defaults>
</compile_context>

<pallas_src>
import functools

import jax
import jax.numpy as jnp
import numpy as np
from jax import lax
from jax.experimental import pallas as pl
from jax.experimental.pallas import tpu as pltpu


# ---------------------------------------------------------------------------
# Tiling / VMEM helpers
# ---------------------------------------------------------------------------
def _pick_tile(rows, per_row_elems, batch, target_elems, min_parallel=4):
    """Sublane rows per grid step: a multiple of 8 (or the full extent).

    Targets ~target_elems f32 elements per channel slab, then shrinks so the
    grid keeps >= min_parallel steps (keeps both v7x TensorCores streaming).
    """
    if rows <= 8:
        return rows
    t = max(8, ((target_elems // max(per_row_elems, 1)) // 8) * 8)
    t = min(t, rows)
    while t > 8 and batch * pl.cdiv(rows, t) < min_parallel:
        t = max(8, ((t // 2) // 8) * 8)
    return t


def _vmem_limit_bytes():
    """~half of physical VMEM: 64 MiB on v5e/v6e (128 MiB), 32 MiB on v7x."""
    try:
        cap = int(pltpu.get_tpu_info().vmem_capacity_bytes)
    except Exception:
        cap = 64 * 1024 * 1024
    return int(min(max(cap // 2, 32 * 1024 * 1024), 64 * 1024 * 1024))


# ---------------------------------------------------------------------------
# Pallas kernels (flo is None)
# ---------------------------------------------------------------------------
def _reproject_rows_kernel(z_ref, o_ref, *, imH, imW, inv_f, th):
    # z_ref: (1, th, W)   o_ref: (1, 3, th, W); rows r0..r0+th of the image.
    r0 = pl.program_id(1) * th
    z = z_ref[0, :, :].astype(jnp.float32)
    # Row-invariant column term as (1, W) and column-invariant row term as
    # (th, 1): no per-pixel int->f32 casts, no divides (inv_f precomputed).
    x_vec = (lax.broadcasted_iota(jnp.int32, (1, imW), 1).astype(jnp.float32)
             - 0.5 * imW) * inv_f
    y_vec = ((lax.broadcasted_iota(jnp.int32, (th, 1), 0) + r0)
             .astype(jnp.float32) - 0.5 * imH) * inv_f
    o_ref[0, 0, :, :] = (x_vec * z).astype(o_ref.dtype)
    o_ref[0, 1, :, :] = (y_vec * z).astype(o_ref.dtype)
    o_ref[0, 2, :, :] = z.astype(o_ref.dtype)


def _reproject_flat_kernel(z_ref, o_ref, *, imH, imW, log2w, inv_f, tr):
    # Lane-dense layout: the image is viewed as (H*W // 128, 128) pixels.
    # z_ref: (1, tr, 128)   o_ref: (1, 3, tr, 128)
    p0 = pl.program_id(1) * (tr * 128)          # flat pixel index of block start
    z = z_ref[0, :, :].astype(jnp.float32)
    sub = lax.broadcasted_iota(jnp.int32, (tr, 128), 0)
    lane = lax.broadcasted_iota(jnp.int32, (tr, 128), 1)
    flat = p0 + sub * 128 + lane                # row-major pixel index
    col = flat & (imW - 1)                      # W is a power of two
    row = flat >> log2w
    x = (col.astype(jnp.float32) - 0.5 * imW) * inv_f
    y = (row.astype(jnp.float32) - 0.5 * imH) * inv_f
    o_ref[0, 0, :, :] = (x * z).astype(o_ref.dtype)
    o_ref[0, 1, :, :] = (y * z).astype(o_ref.dtype)
    o_ref[0, 2, :, :] = z.astype(o_ref.dtype)


# ---------------------------------------------------------------------------
# flo branch: single fused XLA computation (gather + elementwise)
# ---------------------------------------------------------------------------
def _reproject_with_flow(z, flo, imH, imW, inv_f, out_dtype):
    """u = mesh + flo; zs = bilinear border sample of z at (u, v)
    (align_corners=True semantics); out = (x*zs, y*zs, zs)."""
    B = z.shape[0]
    zf = z.astype(jnp.float32)
    col = jnp.arange(imW, dtype=jnp.float32)[None, None, :]
    row = jnp.arange(imH, dtype=jnp.float32)[None, :, None]
    u = col + flo[:, 0].astype(jnp.float32)
    v = row + flo[:, 1].astype(jnp.float32)
    xc = jnp.clip(u, 0.0, imW - 1.0)            # padding_mode='border'
    yc = jnp.clip(v, 0.0, imH - 1.0)
    x0f = jnp.floor(xc)
    y0f = jnp.floor(yc)
    wx = xc - x0f
    wy = yc - y0f
    x0 = x0f.astype(jnp.int32)
    y0 = y0f.astype(jnp.int32)
    x1 = jnp.minimum(x0 + 1, imW - 1)
    y1 = jnp.minimum(y0 + 1, imH - 1)
    zflat = zf.reshape(B, imH * imW)

    # TODO(synk): if this flattened minor-axis gather scalarizes on TPU,
    # restructure as row gather + in-row lane gather or a Pallas DMA gather.
    def tap(yi, xi):
        idx = (yi * imW + xi).reshape(B, imH * imW)
        return jnp.take_along_axis(zflat, idx, axis=1).reshape(B, imH, imW)

    zs = (tap(y0, x0) * (1.0 - wy) * (1.0 - wx)
          + tap(y0, x1) * (1.0 - wy) * wx
          + tap(y1, x0) * wy * (1.0 - wx)
          + tap(y1, x1) * wy * wx)
    x = (u - 0.5 * imW) * inv_f
    y = (v - 0.5 * imH) * inv_f
    return jnp.stack([x * zs, y * zs, zs], axis=1).astype(out_dtype)


# ---------------------------------------------------------------------------
# Public wrapper (forward of Reproject3D)
# ---------------------------------------------------------------------------
def reproject3d(z, flo=None, *, imH, imW, f, tile_target_elems=512 * 1024):
    B, H, W = z.shape
    assert (H, W) == (imH, imW)
    inv_f = 1.0 / float(f)
    out_dtype = z.dtype if flo is None else jnp.promote_types(z.dtype, flo.dtype)

    if flo is not None:
        # TODO(synk): data-dependent bilinear gather has no efficient Mosaic
        # in-kernel equivalent; this branch is one fused XLA computation so
        # the warped-z never round-trips HBM and flo is read once.
        return _reproject_with_flow(z, flo, imH, imW, inv_f, out_dtype)

    isz_in = jnp.dtype(z.dtype).itemsize
    isz_out = jnp.dtype(out_dtype).itemsize
    cost = pl.CostEstimate(flops=6 * B * H * W, transcendentals=0,
                           bytes_accessed=B * H * W * (isz_in + 3 * isz_out))
    cp = pltpu.CompilerParams(
        dimension_semantics=("parallel", "parallel"),
        vmem_limit_bytes=_vmem_limit_bytes())

    lane_dense_flat = (W % 128 != 0) and ((W & (W - 1)) == 0) and ((H * W) % 128 == 0)
    if lane_dense_flat:
        n_rows = (H * W) // 128
        tr = _pick_tile(n_rows, 128, B, tile_target_elems)
        out = pl.pallas_call(
            functools.partial(_reproject_flat_kernel, imH=H, imW=W,
                              log2w=int(W).bit_length() - 1, inv_f=inv_f, tr=tr),
            out_shape=jax.ShapeDtypeStruct((B, 3, n_rows, 128), out_dtype),
            grid=(B, pl.cdiv(n_rows, tr)),
            in_specs=[pl.BlockSpec((1, tr, 128), lambda b, r: (b, r, 0))],
            out_specs=pl.BlockSpec((1, 3, tr, 128), lambda b, r: (b, 0, r, 0)),
            compiler_params=cp,
            cost_estimate=cost,
        )(z.reshape(B, n_rows, 128))
        return out.reshape(B, 3, H, W)

    # W a multiple of 128 (already lane dense) or general fallback.
    # TODO(synk): W neither a multiple of 128 nor a power of two -> masked
    # partial-lane stores; add a padded relayout if such shapes ship.
    th = _pick_tile(H, W, B, tile_target_elems)
    return pl.pallas_call(
        functools.partial(_reproject_rows_kernel, imH=H, imW=W, inv_f=inv_f, th=th),
        out_shape=jax.ShapeDtypeStruct((B, 3, H, W), out_dtype),
        grid=(B, pl.cdiv(H, th)),
        in_specs=[pl.BlockSpec((1, th, W), lambda b, r: (b, r, 0))],
        out_specs=pl.BlockSpec((1, 3, th, W), lambda b, r: (b, 0, r, 0)),
        compiler_params=cp,
        cost_estimate=cost,
    )(z)


# ---------------------------------------------------------------------------
# Pure-JAX reference mirroring the PyTorch module semantics.
# ---------------------------------------------------------------------------
def reproject3d_ref(z, flo, imH, imW, f):
    u = jnp.tile(jnp.arange(imW, dtype=jnp.float32)[None, :], (imH, 1))
    v = jnp.tile(jnp.arange(imH, dtype=jnp.float32)[:, None], (1, imW))
    if flo is None:
        x = (u - imW / 2) / f
        y = (v - imH / 2) / f
        xy = jnp.stack([x, y], 0)
        z_ = z[:, None]
        return jnp.concatenate([xy[None] * z_, z_], axis=1)
    un = u[None] + flo[:, 0]
    vn = v[None] + flo[:, 1]
    xc = jnp.clip(un, 0.0, imW - 1.0)
    yc = jnp.clip(vn, 0.0, imH - 1.0)
    x0f = jnp.floor(xc); y0f = jnp.floor(yc)
    wx = xc - x0f; wy = yc - y0f
    x0 = x0f.astype(jnp.int32); y0 = y0f.astype(jnp.int32)
    x1 = jnp.minimum(x0 + 1, imW - 1); y1 = jnp.minimum(y0 + 1, imH - 1)

    def sample(zi, y0i, x0i, y1i, x1i, wxi, wyi):
        return (zi[y0i, x0i] * (1 - wyi) * (1 - wxi)
                + zi[y0i, x1i] * (1 - wyi) * wxi
                + zi[y1i, x0i] * wyi * (1 - wxi)
                + zi[y1i, x1i] * wyi * wxi)

    zs = jax.vmap(sample)(z, y0, x0, y1, x1, wx, wy)
    x = (un - imW / 2) / f
    y = (vn - imH / 2) / f
    return jnp.stack([x * zs, y * zs, zs], axis=1)


if __name__ == "__main__":
    key = jax.random.PRNGKey(0)

    def check(B, H, W, f, with_flo, tile_target_elems=512 * 1024, seed_off=0):
        kz, kf = jax.random.split(jax.random.fold_in(key, seed_off))
        z = jax.random.uniform(kz, (B, H, W), jnp.float32, 0.5, 5.0)
        flo = (jax.random.normal(kf, (B, 2, H, W), jnp.float32) * 2.0
               if with_flo else None)
        fn = jax.jit(functools.partial(reproject3d, imH=H, imW=W, f=f,
                                       tile_target_elems=tile_target_elems))
        out = jax.block_until_ready(fn(z, flo))
        ref = reproject3d_ref(z, flo, H, W, f)
        np.testing.assert_allclose(np.asarray(out), np.asarray(ref),
                                   rtol=1e-4, atol=1e-5)

    # Main shapes: lane-dense flat Pallas path + fused-XLA flo branch.
    check(2, 16, 16, 8.0, with_flo=False)
    check(2, 16, 16, 8.0, with_flo=True)
    # Partial edge tile on the flat lane-dense path (10 rows of 128, tr=8).
    check(2, 80, 16, 8.0, with_flo=False, tile_target_elems=1024, seed_off=1)
    # Row-tiled fallback path, H not a multiple of 8/th (partial last tile).
    check(2, 36, 20, 8.0, with_flo=False, tile_target_elems=64, seed_off=2)
    print("KERNEL_OK")
</pallas_src>

<mosaic_0001>
module attributes {stable_mosaic.version = 11 : i64} {
  func.func @_reproject_flat_kernel(%arg0: i32, %arg1: i32, %arg2: memref<1x2x128xf32, #tpu.memory_space<vmem>>, %arg3: memref<1x3x2x128xf32, #tpu.memory_space<vmem>>) attributes {dimension_semantics = [#tpu.dimension_semantics<parallel>, #tpu.dimension_semantics<parallel>], iteration_bounds = array<i64: 2, 1>, scalar_prefetch = 0 : i64, scratch_operands = 0 : i64, tpu.core_type = #tpu.core_type<tc>, window_params = [{transform_indices = @transform_0, window_bounds = array<i64: 1, 2, 128>}, {transform_indices = @transform_1, window_bounds = array<i64: 1, 3, 2, 128>}]} {
    %c256_i32 = arith.constant 256 : i32
    %0 = arith.muli %arg1, %c256_i32 : i32
    %c0 = arith.constant 0 : index
    %c0_0 = arith.constant 0 : index
    %c0_1 = arith.constant 0 : index
    %1 = vector.load %arg2[%c0, %c0_0, %c0_1] : memref<1x2x128xf32, #tpu.memory_space<vmem>>, vector<1x2x128xf32>
    %2 = vector.shape_cast %1 : vector<1x2x128xf32> to vector<2x128xf32>
    %3 = tpu.iota {dimensions = array<i32: 0>} : vector<2x128xi32>
    %4 = tpu.iota {dimensions = array<i32: 1>} : vector<2x128xi32>
    %c128_i32 = arith.constant 128 : i32
    %5 = vector.broadcast %c128_i32 : i32 to vector<2x128xi32>
    %6 = arith.muli %3, %5 : vector<2x128xi32>
    %7 = vector.broadcast %0 : i32 to vector<2x128xi32>
    %8 = arith.addi %7, %6 : vector<2x128xi32>
    %9 = arith.addi %8, %4 : vector<2x128xi32>
    %c15_i32 = arith.constant 15 : i32
    %10 = vector.broadcast %c15_i32 : i32 to vector<2x128xi32>
    %11 = arith.andi %9, %10 : vector<2x128xi32>
    %c4_i32 = arith.constant 4 : i32
    %12 = vector.broadcast %c4_i32 : i32 to vector<2x128xi32>
    %13 = arith.shrsi %9, %12 : vector<2x128xi32>
    %14 = arith.sitofp %11 : vector<2x128xi32> to vector<2x128xf32>
    %cst = arith.constant 8.000000e+00 : f32
    %15 = vector.broadcast %cst : f32 to vector<2x128xf32>
    %16 = arith.subf %14, %15 : vector<2x128xf32>
    %cst_2 = arith.constant 1.250000e-01 : f32
    %17 = vector.broadcast %cst_2 : f32 to vector<2x128xf32>
    %18 = arith.mulf %16, %17 : vector<2x128xf32>
    %19 = arith.sitofp %13 : vector<2x128xi32> to vector<2x128xf32>
    %cst_3 = arith.constant 8.000000e+00 : f32
    %20 = vector.broadcast %cst_3 : f32 to vector<2x128xf32>
    %21 = arith.subf %19, %20 : vector<2x128xf32>
    %cst_4 = arith.constant 1.250000e-01 : f32
    %22 = vector.broadcast %cst_4 : f32 to vector<2x128xf32>
    %23 = arith.mulf %21, %22 : vector<2x128xf32>
    %24 = arith.mulf %18, %2 : vector<2x128xf32>
    %c0_5 = arith.constant 0 : index
    %c0_6 = arith.constant 0 : index
    %c0_7 = arith.constant 0 : index
    %c0_8 = arith.constant 0 : index
    %25 = vector.load %arg3[%c0_5, %c0_6, %c0_7, %c0_8] : memref<1x3x2x128xf32, #tpu.memory_space<vmem>>, vector<1x1x2x128xf32>
    %26 = vector.shape_cast %25 : vector<1x1x2x128xf32> to vector<2x128xf32>
    %27 = vector.shape_cast %24 : vector<2x128xf32> to vector<1x1x2x128xf32>
    tpu.vector_store %arg3[%c0_5, %c0_6, %c0_7, %c0_8], %27 {strides = array<i32>} : memref<1x3x2x128xf32, #tpu.memory_space<vmem>>, vector<1x1x2x128xf32>,
    %28 = arith.mulf %23, %2 : vector<2x128xf32>
    %c0_9 = arith.constant 0 : index
    %c1 = arith.constant 1 : index
    %c0_10 = arith.constant 0 : index
    %c0_11 = arith.constant 0 : index
    %29 = vector.load %arg3[%c0_9, %c1, %c0_10, %c0_11] : memref<1x3x2x128xf32, #tpu.memory_space<vmem>>, vector<1x1x2x128xf32>
    %30 = vector.shape_cast %29 : vector<1x1x2x128xf32> to vector<2x128xf32>
    %31 = vector.shape_cast %28 : vector<2x128xf32> to vector<1x1x2x128xf32>
    tpu.vector_store %arg3[%c0_9, %c1, %c0_10, %c0_11], %31 {strides = array<i32>} : memref<1x3x2x128xf32, #tpu.memory_space<vmem>>, vector<1x1x2x128xf32>,
    %c0_12 = arith.constant 0 : index
    %c2 = arith.constant 2 : index
    %c0_13 = arith.constant 0 : index
    %c0_14 = arith.constant 0 : index
    %32 = vector.load %arg3[%c0_12, %c2, %c0_13, %c0_14] : memref<1x3x2x128xf32, #tpu.memory_space<vmem>>, vector<1x1x2x128xf32>
    %33 = vector.shape_cast %32 : vector<1x1x2x128xf32> to vector<2x128xf32>
    %34 = vector.shape_cast %2 : vector<2x128xf32> to vector<1x1x2x128xf32>
    tpu.vector_store %arg3[%c0_12, %c2, %c0_13, %c0_14], %34 {strides = array<i32>} : memref<1x3x2x128xf32, #tpu.memory_space<vmem>>, vector<1x1x2x128xf32>,
    return
  }
  func.func @transform_0(%arg0: i32, %arg1: i32) -> (i32, i32, i32) {
    %c0_i32 = arith.constant 0 : i32
    %c0_i32_0 = arith.constant 0 : i32
    return %arg0, %arg1, %c0_i32 : i32, i32, i32
  }
  func.func @transform_1(%arg0: i32, %arg1: i32) -> (i32, i32, i32, i32) {
    %c0_i32 = arith.constant 0 : i32
    %c0_i32_0 = arith.constant 0 : i32
    %c0_i32_1 = arith.constant 0 : i32
    return %arg0, %c0_i32, %arg1, %c0_i32_0 : i32, i32, i32, i32
  }
}

</mosaic_0001>

<llo_original>
// kernel: reproject3d.1
$region0: #{reproject3d.1}
  #allocation0 [shape = 'u32[]', space=smem, size = 0x4, offset = 0x4, fixed_abs, tag = 'smem constant byte address 0x4 - core index']
  #allocation1 [shape = 'u32[144,128]{1,0:T(1,128)}', space=vmem, size = 0x12000, scoped, tag = 'internal scratch']
  %s0 = inlined_call_operand.vmem [shape: f32[2,2,128], index: 0, kind: input, shape index: {}]
  %s1 = inlined_call_operand.vmem [shape: f32[2,3,2,128], index: 1, kind: output, shape index: {}]
  %s2 = sld [smem:[#allocation0]]
  $region37: #{reproject3d.1} parent=0
    _
  %s4 = ssub.s32 1, %s2
  %s5 = scalar_select 0, %s4, %s2
  loop: start=0, step=1, limit=4
  $region2: #{reproject3d.1} parent=0 // loop_pre_header
    _
  $region3: #{reproject3d.1} parent=0 // loop_header
    %s7 = sphi 0, %s11
    %p8 = scmp.ge.s32.totalorder %s7, 4
    %s14 = sphi 0, %s26
    %s15 = sphi 0, %s22
    %s16 = sphi 0, %s14
    %s17 = sphi 0, %s15
    %s18 = sphi 0, %s16
    %s19 = sphi 0, %s17
    %s31 = sphi 0, %s33
    %s34 = sphi 0, %s31
    %s35 = sphi 0, %s34
    %s51 = sphi 0, %s35
    %s59 = sphi 0, %s61
    %s62 = sphi 0, %s59
    %s63 = sphi 0, %s62
    %s79 = sphi 0, %s63
  $region4: #{reproject3d.1} parent=0 // loop_header_branch
    %10 = sbr.rel (%p8) target = $region8
  $region5: #{reproject3d.1} parent=0 // loop_body
    %s12 = ssub.s32 %s7, 1
    %s13 = ssub.s32 %s7, 2
    %s20 = sadd.s32 1, %s15
    %p21 = scmp.ge.s32.totalorder %s20, 1
    %s22 = scalar_select %p21, 0, %s20
    %s23 = sadd.s32 1, %s14
    %s24 = scalar_select %p21, %s23, %s14
    %p25 = scmp.ge.s32.totalorder %s24, 2
    %s26 = scalar_select %p25, 0, %s24
    %s27 = ssub.s32 %s14, %s26
    %s28 = ssub.s32 %s15, %s22
    %s29 = sor.u32 %s27, %s28
    %p30 = scmp.eq.s32.totalorder %s29, 0
    %s32 = sadd.s32 %s31, 1
    %s33 = scalar_select %p30, %s31, %s32
    %p36 = pneg %p30
    %p37 = scmp.eq.s32.totalorder %s7, 1
    %p38 = por %p36, %p37
    %p39 = scmp.ne.s32.totalorder %s31, %s34
    %p40 = scmp.eq.s32.totalorder %s7, 0
    %p41 = por %p39, %p40
    %p42 = scmp.ne.s32.totalorder %s31, %s34
    %p43 = scmp.eq.s32.totalorder %s12, 1
    %p44 = por %p42, %p43
    %p45 = scmp.ne.s32.totalorder %s34, %s35
    %p46 = scmp.eq.s32.totalorder %s12, 0
    %p47 = por %p45, %p46
    %p48 = scmp.ne.s32.totalorder %s34, %s35
    %p49 = scmp.eq.s32.totalorder %s13, 1
    %p50 = por %p48, %p49
    %p52 = scmp.ne.s32.totalorder %s35, %s51
    %p53 = scmp.eq.s32.totalorder %s13, 0
    %p54 = por %p52, %p53
    %s55 = ssub.s32 %s14, %s26
    %s56 = ssub.s32 %s15, %s22
    %s57 = sor.u32 %s55, %s56
    %p58 = scmp.eq.s32.totalorder %s57, 0
    %s60 = sadd.s32 %s59, 1
    %s61 = scalar_select %p58, %s59, %s60
    %p64 = pneg %p58
    %p65 = scmp.eq.s32.totalorder %s7, 1
    %p66 = por %p64, %p65
    %p67 = scmp.ne.s32.totalorder %s59, %s62
    %p68 = scmp.eq.s32.totalorder %s7, 0
    %p69 = por %p67, %p68
    %p70 = scmp.ne.s32.totalorder %s59, %s62
    %p71 = scmp.eq.s32.totalorder %s12, 1
    %p72 = por %p70, %p71
    %p73 = scmp.ne.s32.totalorder %s62, %s63
    %p74 = scmp.eq.s32.totalorder %s12, 0
    %p75 = por %p73, %p74
    %p76 = scmp.ne.s32.totalorder %s62, %s63
    %p77 = scmp.eq.s32.totalorder %s13, 1
    %p78 = por %p76, %p77
    %p80 = scmp.ne.s32.totalorder %s63, %s79
    %p81 = scmp.eq.s32.totalorder %s13, 0
    %p82 = por %p80, %p81
    %p83 = scmp.le.s32.totalorder 1, %s7
    %p84 = scmp.lt.s32.totalorder %s7, 3
    %p85 = pnand %p83, %p84
    %p86 = pneg %p85
    // Predicated region
    $region9: #{reproject3d.1} parent=5 // pred_check
      _
    $region10: #{reproject3d.1} parent=5 // pred_check_branch
      %88 = sbr.rel (%p85) target = $region12
    $region11: #{reproject3d.1} parent=5 // pred_region
      %s89 = ssub.s32 %s7, 1
    $region12: #{reproject3d.1} parent=5 // pred_fallthru
      _
    %p90 = scmp.lt.s32.totalorder %s7, 2
    // Predicated region
    $region13: #{reproject3d.1} parent=5 // pred_check
      %p91 = pneg %p90
    $region14: #{reproject3d.1} parent=5 // pred_check_branch
      %93 = sbr.rel (%p91) target = $region16
    $region15: #{reproject3d.1} parent=5 // pred_region
      // Predicated region
      $region17: #{reproject3d.1} parent=15 // pred_check
        %p94 = pneg %p41
      $region18: #{reproject3d.1} parent=15 // pred_check_branch
        %96 = sbr.rel (%p94) target = $region20
      $region19: #{reproject3d.1} parent=15 // pred_region
        %p97 = scmp.lt.s32.totalorder %s14, 1
        %s98 = scalar_select %p97, %s14, 1
        %p99 = scmp.lt.s32.totalorder %s15, 0
        %s100 = scalar_select %p99, %s15, 0
        %s101 = sadd.s32 %s100, %s98
        %s102 = smul.addr %s101, 2
        %s103 = scalar_lea.vmem %s0, %s102
      $region20: #{reproject3d.1} parent=15 // pred_fallthru
        _
    $region16: #{reproject3d.1} parent=5 // pred_fallthru
      _
    %p104 = scmp.le.s32.totalorder 1, %s7
    %p105 = scmp.lt.s32.totalorder %s7, 3
    %p106 = pnand %p104, %p105
    %p107 = pneg %p106
    // Predicated region
    $region21: #{reproject3d.1} parent=5 // pred_check
      _
    $region22: #{reproject3d.1} parent=5 // pred_check_branch
      %109 = sbr.rel (%p106) target = $region24
    $region23: #{reproject3d.1} parent=5 // pred_region
      %s110 = ssub.s32 %s7, 1
      %p111 = scmp.lt.s32.totalorder %s16, 1
      %s112 = scalar_select %p111, %s16, 1
      %p113 = scmp.lt.s32.totalorder %s17, 0
      %s114 = scalar_select %p113, %s17, 0
      %s115 = sadd.s32 %s114, %s112
      %s116 = smul.addr %s115, 2
      %s117 = scalar_lea.vmem %s0, %s116
      %p118 = pneg %p47
      %p119 = pneg %p44
      %p120 = pneg %p75
      %p121 = pneg %p72
      %p122 = scmp.lt.s32.totalorder %s16, 1
      %s123 = scalar_select %p122, %s16, 1
      %p124 = scmp.lt.s32.totalorder %s17, 0
      %s125 = scalar_select %p124, %s17, 0
      %s126 = smul.addr %s123, 3
      %s127 = sadd.s32 %s125, %s126
      %s128 = smul.addr %s127, 2
      %s129 = scalar_lea.vmem %s1, %s128
      %p130 = scmp.lt.s32.totalorder %s16, 1
      %s131 = scalar_select %p130, %s16, 1
      %p132 = scmp.lt.s32.totalorder %s17, 0
      %s133 = scalar_select %p132, %s17, 0
      %s134 = sadd.s32 %s133, %s131
      %s135 = smul.addr %s134, 2
      %s136 = scalar_lea.vmem %s0, %s135
      %p137 = scmp.lt.s32.totalorder %s16, 1
      %s138 = scalar_select %p137, %s16, 1
      %p139 = scmp.lt.s32.totalorder %s17, 0
      %s140 = scalar_select %p139, %s17, 0
      %s141 = smul.addr %s138, 3
      %s142 = sadd.s32 %s140, %s141
      %s143 = smul.addr %s142, 2
      %s144 = scalar_lea.vmem %s1, %s143
      %s145 = smul.u32 %s17, 256
      %v146 = vld [vmem:[%s136] sm:$0x3]
      %v147 = vlaneseq
      %v148 = vshrl.u32 %v147, 7
      %v149 = vlaneseq
      %v150 = vand.u32 %v149, 127
      %v151 = vmul.u32 %v148, 128
      %v152 = vstv %s145
      %v153 = vadd.s32 %v152, %v151
      %v154 = vadd.s32 %v153, %v150
      %v155 = vand.u32 %v154, 15
      %v156 = vshra.s32 %v154, 4
      %v157 = vcvt.s32.f32 %v155
      %v158 = vsub.f32 %v157, 8.0
      %v159 = vmul.f32 %v158, 0.125
      %v160 = vcvt.s32.f32 %v156
      %v161 = vsub.f32 %v160, 8.0
      %v162 = vmul.f32 %v161, 0.125
      %v163 = vmul.f32 %v159, %v146
      %164 = vst [vmem:[%s144] sm:$0x3] %v163
      %v165 = vmul.f32 %v162, %v146
      %s166 = scalar_lea.vmem %s144, 2
      %167 = vst [vmem:[%s166] sm:$0x3] %v165
      %s168 = scalar_lea.vmem %s144, 4
      %169 = vst [vmem:[%s168] sm:$0x3] %v146
      %p170 = scmp.lt.s32.totalorder %s16, 1
      %s171 = scalar_select %p170, %s16, 1
      %p172 = scmp.lt.s32.totalorder %s17, 0
      %s173 = scalar_select %p172, %s17, 0
      %s174 = smul.addr %s171, 3
      %s175 = sadd.s32 %s173, %s174
      %s176 = smul.addr %s175, 2
      %s177 = scalar_lea.vmem %s1, %s176
      // Predicated region
      $region25: #{reproject3d.1} parent=23 // pred_check
        %p178 = pneg %p72
      $region26: #{reproject3d.1} parent=23 // pred_check_branch
        %180 = sbr.rel (%p178) target = $region28
      $region27: #{reproject3d.1} parent=23 // pred_region
        _
      $region28: #{reproject3d.1} parent=23 // pred_fallthru
        _
    $region24: #{reproject3d.1} parent=5 // pred_fallthru
      _
    %p181 = scmp.le.s32.totalorder 2, %s7
    // Predicated region
    $region29: #{reproject3d.1} parent=5 // pred_check
      %p182 = pneg %p181
    $region30: #{reproject3d.1} parent=5 // pred_check_branch
      %184 = sbr.rel (%p182) target = $region32
    $region31: #{reproject3d.1} parent=5 // pred_region
      %s185 = ssub.s32 %s7, 2
      // Predicated region
      $region33: #{reproject3d.1} parent=31 // pred_check
        %p186 = pneg %p78
      $region34: #{reproject3d.1} parent=31 // pred_check_branch
        %188 = sbr.rel (%p186) target = $region36
      $region35: #{reproject3d.1} parent=31 // pred_region
        %p189 = scmp.lt.s32.totalorder %s18, 1
        %s190 = scalar_select %p189, %s18, 1
        %p191 = scmp.lt.s32.totalorder %s19, 0
        %s192 = scalar_select %p191, %s19, 0
        %s193 = smul.addr %s190, 3
        %s194 = sadd.s32 %s192, %s193
        %s195 = smul.addr %s194, 2
        %s196 = scalar_lea.vmem %s1, %s195
      $region36: #{reproject3d.1} parent=31 // pred_fallthru
        _
    $region32: #{reproject3d.1} parent=5 // pred_fallthru
      _
  $region6: #{reproject3d.1} parent=0 // loop_footer
    %s11 = sadd.s32 1, %s7
  $region7: #{reproject3d.1} parent=0 // loop_footer_branch
    %6 = sbr.rel target = $region3
  $region8: #{reproject3d.1} parent=0 // loop_exit
    _

</llo_original>
